<compile_context>
chip_gen: v6e
topology: v6e:2x2x1
jax: 0.10.0
libtpu: 0.0.40
codegen_flags: <defaults>
</compile_context>

<pallas_src>
from functools import partial

import jax
import jax.numpy as jnp
from jax.experimental import pallas as pl
from jax.experimental.pallas import tpu as pltpu

EMB_DIM = 5
XA_DIM = 3
IN_DIM = EMB_DIM + XA_DIM   # 8
HIDDEN = 8
OUT_DIM = 1
LANE = 128


def _round_up(n, m):
    return (n + m - 1) // m * m


def _cdiv(a, b):
    return (a + b - 1) // b


def label_model_kernel(x_ref, w1_ref, b1_ref, w2_ref, b2_ref, o_ref, *, approx):
    # x_ref:  (IN_DIM, TILE_B) feature-major activations (batch on the 128-lane axis),
    #         in the compute dtype (f32 or bf16).
    # w1_ref: (HIDDEN, IN_DIM), w2_ref: (OUT_DIM, HIDDEN)  -- PyTorch (out, in) layout,
    #         same compute dtype as x (native bf16 MXU path when act_dtype=bf16).
    # b1_ref: (HIDDEN, 1), b2_ref: (OUT_DIM, 1)            -- f32 column vectors.
    x = x_ref[...]
    # Linear 1 + ReLU: accumulate in f32, then drop back to the compute dtype so the
    # second matmul is also a native (bf16 x bf16 -> f32) MXU op when act_dtype=bf16.
    h = jnp.dot(w1_ref[...], x, preferred_element_type=jnp.float32) + b1_ref[...]
    h = jnp.maximum(h, 0.0).astype(x.dtype)
    # Linear 2 (f32 accumulation) + Sigmoid.  exp on the EUP; approx recip also lands on
    # the EUP slot (frees VALU on v7x).  exp(-z) overflow for very negative z still yields
    # the correct 0.0.  TODO(synk): switch to a sign-split stable sigmoid if inputs become
    # unbounded.
    z = jnp.dot(w2_ref[...], h, preferred_element_type=jnp.float32) + b2_ref[...]
    o_ref[...] = pl.reciprocal(1.0 + jnp.exp(-z), approx=approx).astype(o_ref.dtype)


@partial(jax.jit, static_argnames=("tile_b", "act_dtype", "approx_sigmoid"))
def label_model_forward(emb, x_a, w1, b1, w2, b2, *,
                        tile_b=None, act_dtype=jnp.bfloat16, approx_sigmoid=True):
    """Forward pass of LabelModel.

    emb: (B, 5), x_a: (B, 3) float32 activations.
    w1: (8, 8), b1: (8,), w2: (1, 8), b2: (1,)  in PyTorch nn.Linear (out, in) layout.
    Returns sigmoid(relu(cat[emb, x_a] @ w1.T + b1) @ w2.T + b2) with shape (B, 1), f32.
    """
    B = emb.shape[0]
    act_bytes = jnp.dtype(act_dtype).itemsize

    # Feature-major packing: (IN_DIM, B) so the batch sits on the 128-lane axis.  Being
    # inside this jit, the concat + transpose + cast + pad fuse into one copy pass.
    x_t = jnp.concatenate([emb, x_a], axis=1).T.astype(act_dtype)      # (8, B)

    # Pad only up to lane alignment; the ragged final grid block is masked by Pallas.
    b_pad = _round_up(B, LANE)
    if b_pad != B:
        x_t = jnp.pad(x_t, ((0, 0), (0, b_pad - B)))

    # Tile selection: ~2 MiB of activations per step (amortizes ~0.35 us/step overhead,
    # near HBM roofline), but keep ~8 grid steps when B allows so both v7x TensorCores
    # stay fed and DMA/compute overlap survives.
    if tile_b is None:
        cap = (2 << 20) // (IN_DIM * act_bytes)        # 65536 (f32) / 131072 (bf16)
        tile_b = min(cap, _round_up(_cdiv(b_pad, 8), LANE))
    # Lane-align and clamp so the double-buffered working set stays well under scoped VMEM.
    per_row_bytes = 2 * (IN_DIM * act_bytes + OUT_DIM * 4)             # in + out, x2 buffers
    max_tile = max(LANE, ((40 << 20) // per_row_bytes) // LANE * LANE)
    tile_b = max(LANE, min(_round_up(tile_b, LANE), b_pad, max_tile))
    grid = (_cdiv(b_pad, tile_b),)

    # Params: weights in the compute dtype (native bf16 matmuls when act_dtype=bf16),
    # biases as f32 lane-broadcast columns.
    w1_c = w1.astype(act_dtype)                          # (HIDDEN, IN_DIM)
    b1_c = b1.reshape(HIDDEN, 1).astype(jnp.float32)
    w2_c = w2.astype(act_dtype)                          # (OUT_DIM, HIDDEN)
    b2_c = b2.reshape(OUT_DIM, 1).astype(jnp.float32)

    # Only raise the scoped-VMEM limit if a (user-supplied) tile needs it; the default
    # tiles use ~5 MiB double-buffered, inside v5e's 16 MiB default.
    working = tile_b * per_row_bytes + (1 << 16)
    cp_kwargs = dict(dimension_semantics=("parallel",))  # shard batch across v7x's 2 TCs
    if working > (12 << 20):
        cp_kwargs["vmem_limit_bytes"] = int(min(working + (8 << 20), 48 << 20))

    out_t = pl.pallas_call(
        partial(label_model_kernel, approx=approx_sigmoid),
        out_shape=jax.ShapeDtypeStruct((OUT_DIM, b_pad), jnp.float32),
        grid=grid,
        in_specs=[
            pl.BlockSpec((IN_DIM, tile_b), lambda i: (0, i)),     # activations: tiled over B
            pl.BlockSpec((HIDDEN, IN_DIM), lambda i: (0, 0)),     # params: resident in VMEM
            pl.BlockSpec((HIDDEN, 1), lambda i: (0, 0)),
            pl.BlockSpec((OUT_DIM, HIDDEN), lambda i: (0, 0)),
            pl.BlockSpec((OUT_DIM, 1), lambda i: (0, 0)),
        ],
        out_specs=pl.BlockSpec((OUT_DIM, tile_b), lambda i: (0, i)),  # lane-dense output
        compiler_params=pltpu.CompilerParams(**cp_kwargs),
    )(x_t, w1_c, b1_c, w2_c, b2_c)

    # Contiguous slice + free reshape (no transpose) back to (B, 1).
    return out_t[0, :B].reshape(B, 1)


def reference_forward(emb, x_a, w1, b1, w2, b2):
    x = jnp.concatenate([emb, x_a], axis=1)
    h = jnp.maximum(x @ w1.T + b1, 0.0)
    return jax.nn.sigmoid(h @ w2.T + b2)


if __name__ == "__main__":
    key = jax.random.PRNGKey(0)
    k_emb, k_xa, k_w1, k_b1, k_w2, k_b2 = jax.random.split(key, 6)

    # Small batch, deliberately not a multiple of 128: exercises lane padding + the ragged
    # final grid block with the cdiv grid.
    B = 300
    emb = jax.random.normal(k_emb, (B, EMB_DIM), dtype=jnp.float32)
    x_a = jax.random.normal(k_xa, (B, XA_DIM), dtype=jnp.float32)

    # PyTorch-style Linear init, weights in (out, in) layout like nn.Linear.
    bound1 = 1.0 / jnp.sqrt(jnp.float32(IN_DIM))
    w1 = jax.random.uniform(k_w1, (HIDDEN, IN_DIM), minval=-bound1, maxval=bound1, dtype=jnp.float32)
    b1 = jax.random.uniform(k_b1, (HIDDEN,), minval=-bound1, maxval=bound1, dtype=jnp.float32)
    bound2 = 1.0 / jnp.sqrt(jnp.float32(HIDDEN))
    w2 = jax.random.uniform(k_w2, (OUT_DIM, HIDDEN), minval=-bound2, maxval=bound2, dtype=jnp.float32)
    b2 = jax.random.uniform(k_b2, (OUT_DIM,), minval=-bound2, maxval=bound2, dtype=jnp.float32)

    ref = reference_forward(emb, x_a, w1, b1, w2, b2)

    # Exact path (f32 activations, exact reciprocal): matches the reference to 1e-5.
    out_exact = jax.block_until_ready(
        label_model_forward(emb, x_a, w1, b1, w2, b2,
                            tile_b=128, act_dtype=jnp.float32, approx_sigmoid=False))
    assert out_exact.shape == (B, OUT_DIM)
    assert jnp.allclose(out_exact, ref, atol=1e-5, rtol=1e-5)

    # f32 activations with approx reciprocal (EUP) in the sigmoid epilogue.
    out_f32 = jax.block_until_ready(
        label_model_forward(emb, x_a, w1, b1, w2, b2, act_dtype=jnp.float32))
    assert jnp.allclose(out_f32, ref, atol=5e-3)

    # Default fast path: bf16 HBM activations + bf16 matmuls (f32 accumulation) + approx
    # reciprocal.  Compare against the f32 reference evaluated on bf16-rounded inputs.
    out_fast = jax.block_until_ready(label_model_forward(emb, x_a, w1, b1, w2, b2))
    ref_bf = reference_forward(emb.astype(jnp.bfloat16).astype(jnp.float32),
                               x_a.astype(jnp.bfloat16).astype(jnp.float32),
                               w1, b1, w2, b2)
    assert out_fast.shape == (B, OUT_DIM)
    assert jnp.allclose(out_fast, ref_bf, atol=2e-2)

    print("KERNEL_OK")
</pallas_src>

<mosaic_0001>
module attributes {stable_mosaic.version = 11 : i64} {
  func.func @label_model_kernel(%arg0: i32, %arg1: memref<8x128xf32, #tpu.memory_space<vmem>>, %arg2: memref<8x8xf32, #tpu.memory_space<vmem>>, %arg3: memref<8x1xf32, #tpu.memory_space<vmem>>, %arg4: memref<1x8xf32, #tpu.memory_space<vmem>>, %arg5: memref<1x1xf32, #tpu.memory_space<vmem>>, %arg6: memref<1x128xf32, #tpu.memory_space<vmem>>) attributes {dimension_semantics = [#tpu.dimension_semantics<parallel>], iteration_bounds = array<i64: 3>, scalar_prefetch = 0 : i64, scratch_operands = 0 : i64, tpu.core_type = #tpu.core_type<tc>, window_params = [{transform_indices = @transform_0, window_bounds = array<i64: 8, 128>}, {pipeline_mode = #tpu.pipeline_mode<synchronous>, transform_indices = @transform_1, window_bounds = array<i64: 8, 8>}, {pipeline_mode = #tpu.pipeline_mode<synchronous>, transform_indices = @transform_2, window_bounds = array<i64: 8, 1>}, {pipeline_mode = #tpu.pipeline_mode<synchronous>, transform_indices = @transform_3, window_bounds = array<i64: 1, 8>}, {pipeline_mode = #tpu.pipeline_mode<synchronous>, transform_indices = @transform_4, window_bounds = array<i64: 1, 1>}, {transform_indices = @transform_5, window_bounds = array<i64: 1, 128>}]} {
    %c0 = arith.constant 0 : index
    %c0_0 = arith.constant 0 : index
    %0 = vector.load %arg1[%c0, %c0_0] : memref<8x128xf32, #tpu.memory_space<vmem>>, vector<8x128xf32>
    %c0_1 = arith.constant 0 : index
    %c0_2 = arith.constant 0 : index
    %1 = vector.load %arg2[%c0_1, %c0_2] : memref<8x8xf32, #tpu.memory_space<vmem>>, vector<8x8xf32>
    %cst = arith.constant dense<0.000000e+00> : vector<8x128xf32>
    %2 = tpu.matmul %1, %0, %cst {dimension_numbers = #tpu.dot_dimension_numbers<[1], [0], [0], [1], [0, 0, 1, 1], [], []>} : vector<8x8xf32>, vector<8x128xf32>, vector<8x128xf32> -> vector<8x128xf32>
    %c0_3 = arith.constant 0 : index
    %c0_4 = arith.constant 0 : index
    %3 = vector.load %arg3[%c0_3, %c0_4] : memref<8x1xf32, #tpu.memory_space<vmem>>, vector<8x1xf32>
    %4 = vector.broadcast %3 : vector<8x1xf32> to vector<8x128xf32>
    %5 = arith.addf %2, %4 : vector<8x128xf32>
    %cst_5 = arith.constant 0.000000e+00 : f32
    %6 = vector.broadcast %cst_5 : f32 to vector<8x128xf32>
    %7 = arith.maximumf %5, %6 : vector<8x128xf32>
    %c0_6 = arith.constant 0 : index
    %c0_7 = arith.constant 0 : index
    %8 = vector.load %arg4[%c0_6, %c0_7] : memref<1x8xf32, #tpu.memory_space<vmem>>, vector<1x8xf32>
    %cst_8 = arith.constant dense<0.000000e+00> : vector<1x128xf32>
    %9 = tpu.matmul %8, %7, %cst_8 {dimension_numbers = #tpu.dot_dimension_numbers<[1], [0], [0], [1], [0, 0, 1, 1], [], []>} : vector<1x8xf32>, vector<8x128xf32>, vector<1x128xf32> -> vector<1x128xf32>
    %c0_9 = arith.constant 0 : index
    %c0_10 = arith.constant 0 : index
    %10 = vector.load %arg5[%c0_9, %c0_10] : memref<1x1xf32, #tpu.memory_space<vmem>>, vector<1x1xf32>
    %11 = vector.broadcast %10 : vector<1x1xf32> to vector<1x128xf32>
    %12 = arith.addf %9, %11 : vector<1x128xf32>
    %cst_11 = arith.constant 0.000000e+00 : f32
    %13 = vector.broadcast %cst_11 : f32 to vector<1x128xf32>
    %14 = arith.subf %13, %12 : vector<1x128xf32>
    %15 = math.exp %14 : vector<1x128xf32>
    %cst_12 = arith.constant 1.000000e+00 : f32
    %16 = vector.broadcast %cst_12 : f32 to vector<1x128xf32>
    %17 = arith.addf %16, %15 : vector<1x128xf32>
    %18 = tpu.reciprocal %17 : vector<1x128xf32> -> vector<1x128xf32>
    %c0_13 = arith.constant 0 : index
    %c0_14 = arith.constant 0 : index
    %19 = vector.load %arg6[%c0_13, %c0_14] : memref<1x128xf32, #tpu.memory_space<vmem>>, vector<1x128xf32>
    tpu.vector_store %arg6[%c0_13, %c0_14], %18 {strides = array<i32>} : memref<1x128xf32, #tpu.memory_space<vmem>>, vector<1x128xf32>,
    return
  }
  func.func @transform_0(%arg0: i32) -> (i32, i32) {
    %c0_i32 = arith.constant 0 : i32
    %c0_i32_0 = arith.constant 0 : i32
    return %c0_i32, %arg0 : i32, i32
  }
  func.func @transform_1(%arg0: i32) -> (i32, i32) {
    %c0_i32 = arith.constant 0 : i32
    %c0_i32_0 = arith.constant 0 : i32
    %c0_i32_1 = arith.constant 0 : i32
    return %c0_i32, %c0_i32_0 : i32, i32
  }
  func.func @transform_2(%arg0: i32) -> (i32, i32) {
    %c0_i32 = arith.constant 0 : i32
    %c0_i32_0 = arith.constant 0 : i32
    %c0_i32_1 = arith.constant 0 : i32
    return %c0_i32, %c0_i32_0 : i32, i32
  }
  func.func @transform_3(%arg0: i32) -> (i32, i32) {
    %c0_i32 = arith.constant 0 : i32
    %c0_i32_0 = arith.constant 0 : i32
    %c0_i32_1 = arith.constant 0 : i32
    return %c0_i32, %c0_i32_0 : i32, i32
  }
  func.func @transform_4(%arg0: i32) -> (i32, i32) {
    %c0_i32 = arith.constant 0 : i32
    %c0_i32_0 = arith.constant 0 : i32
    %c0_i32_1 = arith.constant 0 : i32
    return %c0_i32, %c0_i32_0 : i32, i32
  }
  func.func @transform_5(%arg0: i32) -> (i32, i32) {
    %c0_i32 = arith.constant 0 : i32
    %c0_i32_0 = arith.constant 0 : i32
    return %c0_i32, %arg0 : i32, i32
  }
}

</mosaic_0001>

<llo_original>
// kernel: label_model_forward.1
$region0: #{label_model_forward.1}
  #allocation0 [shape = 'u32[]', space=smem, size = 0x4, offset = 0x4, fixed_abs, tag = 'smem constant byte address 0x4 - core index']
  #allocation1 [shape = 'u32[144,128]{1,0:T(1,128)}', space=vmem, size = 0x12000, scoped, tag = 'internal scratch']
  #allocation2 [shape = 'f32[1,1]{1,0:T(1,128)S(1)}', space=vmem, size = 0x200, scoped, tag = 'scoped memory for label_model_forward.1']
  %s0 = inlined_call_operand.vmem [shape: f32[8,384], index: 0, kind: input, shape index: {}]
  %s1 = inlined_call_operand.vmem [shape: f32[8,8], index: 1, kind: input, shape index: {}]
  %s2 = inlined_call_operand.vmem [shape: f32[8,1], index: 2, kind: input, shape index: {}]
  %s3 = inlined_call_operand.vmem [shape: f32[1,8], index: 3, kind: input, shape index: {}]
  %s4 = inlined_call_operand.<no memory space> [shape: f32[1,1], index: 4, kind: input, shape index: {}]
  %s5 = inlined_call_operand.vmem [shape: f32[1,384], index: 5, kind: output, shape index: {}]
  %s6 = sld [smem:[#allocation0]]
  $region53: #{label_model_forward.1} parent=0
    _
  %s8 = ssub.s32 1, %s6
  %s9 = scalar_select 0, %s8, %s6
  %v10 = vstv %s4
  %11 = vst [vmem:[#allocation2] sm:$0x1] %v10
  loop: start=0, step=1, limit=5
  $region2: #{label_model_forward.1} parent=0 // loop_pre_header
    _
  $region3: #{label_model_forward.1} parent=0 // loop_header
    %s13 = sphi 0, %s17
    %p14 = scmp.ge.s32.totalorder %s13, 5
    %s23 = sphi 0, %s25
    %s26 = sphi 0, %s23
    %s27 = sphi 0, %s26
    %s43 = sphi 0, %s27
    %s47 = sphi 0, %s47
    %s49 = sphi 0, %s47
    %s50 = sphi 0, %s49
    %s64 = sphi 0, %s50
    %s68 = sphi 0, %s68
    %s70 = sphi 0, %s68
    %s71 = sphi 0, %s70
    %s85 = sphi 0, %s71
    %s89 = sphi 0, %s89
    %s91 = sphi 0, %s89
    %s92 = sphi 0, %s91
    %s106 = sphi 0, %s92
    %s110 = sphi 0, %s110
    %s112 = sphi 0, %s110
    %s113 = sphi 0, %s112
    %s127 = sphi 0, %s113
    %s133 = sphi 0, %s135
    %s136 = sphi 0, %s133
    %s137 = sphi 0, %s136
    %s153 = sphi 0, %s137
  $region4: #{label_model_forward.1} parent=0 // loop_header_branch
    %16 = sbr.rel (%p14) target = $region8
  $region5: #{label_model_forward.1} parent=0 // loop_body
    %s18 = ssub.s32 %s13, 1
    %s19 = ssub.s32 %s13, 2
    %s20 = sadd.s32 %s13, 1
    %s21 = ssub.s32 %s13, %s20
    %p22 = scmp.eq.s32.totalorder %s21, 0
    %s24 = sadd.s32 %s23, 1
    %s25 = scalar_select %p22, %s23, %s24
    %p28 = pneg %p22
    %p29 = scmp.eq.s32.totalorder %s13, 2
    %p30 = por %p28, %p29
    %p31 = scmp.ne.s32.totalorder %s23, %s26
    %p32 = scmp.eq.s32.totalorder %s13, 0
    %p33 = por %p31, %p32
    %p34 = scmp.ne.s32.totalorder %s23, %s26
    %p35 = scmp.eq.s32.totalorder %s18, 2
    %p36 = por %p34, %p35
    %p37 = scmp.ne.s32.totalorder %s26, %s27
    %p38 = scmp.eq.s32.totalorder %s18, 0
    %p39 = por %p37, %p38
    %p40 = scmp.ne.s32.totalorder %s26, %s27
    %p41 = scmp.eq.s32.totalorder %s19, 2
    %p42 = por %p40, %p41
    %p44 = scmp.ne.s32.totalorder %s27, %s43
    %p45 = scmp.eq.s32.totalorder %s19, 0
    %p46 = por %p44, %p45
    %s48 = sadd.s32 %s47, 1
    %p51 = scmp.eq.s32.totalorder %s13, 2
    %p52 = scmp.ne.s32.totalorder %s47, %s49
    %p53 = scmp.eq.s32.totalorder %s13, 0
    %p54 = por %p52, %p53
    %p55 = scmp.ne.s32.totalorder %s47, %s49
    %p56 = scmp.eq.s32.totalorder %s18, 2
    %p57 = por %p55, %p56
    %p58 = scmp.ne.s32.totalorder %s49, %s50
    %p59 = scmp.eq.s32.totalorder %s18, 0
    %p60 = por %p58, %p59
    %p61 = scmp.ne.s32.totalorder %s49, %s50
    %p62 = scmp.eq.s32.totalorder %s19, 2
    %p63 = por %p61, %p62
    %p65 = scmp.ne.s32.totalorder %s50, %s64
    %p66 = scmp.eq.s32.totalorder %s19, 0
    %p67 = por %p65, %p66
    %s69 = sadd.s32 %s68, 1
    %p72 = scmp.eq.s32.totalorder %s13, 2
    %p73 = scmp.ne.s32.totalorder %s68, %s70
    %p74 = scmp.eq.s32.totalorder %s13, 0
    %p75 = por %p73, %p74
    %p76 = scmp.ne.s32.totalorder %s68, %s70
    %p77 = scmp.eq.s32.totalorder %s18, 2
    %p78 = por %p76, %p77
    %p79 = scmp.ne.s32.totalorder %s70, %s71
    %p80 = scmp.eq.s32.totalorder %s18, 0
    %p81 = por %p79, %p80
    %p82 = scmp.ne.s32.totalorder %s70, %s71
    %p83 = scmp.eq.s32.totalorder %s19, 2
    %p84 = por %p82, %p83
    %p86 = scmp.ne.s32.totalorder %s71, %s85
    %p87 = scmp.eq.s32.totalorder %s19, 0
    %p88 = por %p86, %p87
    %s90 = sadd.s32 %s89, 1
    %p93 = scmp.eq.s32.totalorder %s13, 2
    %p94 = scmp.ne.s32.totalorder %s89, %s91
    %p95 = scmp.eq.s32.totalorder %s13, 0
    %p96 = por %p94, %p95
    %p97 = scmp.ne.s32.totalorder %s89, %s91
    %p98 = scmp.eq.s32.totalorder %s18, 2
    %p99 = por %p97, %p98
    %p100 = scmp.ne.s32.totalorder %s91, %s92
    %p101 = scmp.eq.s32.totalorder %s18, 0
    %p102 = por %p100, %p101
    %p103 = scmp.ne.s32.totalorder %s91, %s92
    %p104 = scmp.eq.s32.totalorder %s19, 2
    %p105 = por %p103, %p104
    %p107 = scmp.ne.s32.totalorder %s92, %s106
    %p108 = scmp.eq.s32.totalorder %s19, 0
    %p109 = por %p107, %p108
    %s111 = sadd.s32 %s110, 1
    %p114 = scmp.eq.s32.totalorder %s13, 2
    %p115 = scmp.ne.s32.totalorder %s110, %s112
    %p116 = scmp.eq.s32.totalorder %s13, 0
    %p117 = por %p115, %p116
    %p118 = scmp.ne.s32.totalorder %s110, %s112
    %p119 = scmp.eq.s32.totalorder %s18, 2
    %p120 = por %p118, %p119
    %p121 = scmp.ne.s32.totalorder %s112, %s113
    %p122 = scmp.eq.s32.totalorder %s18, 0
    %p123 = por %p121, %p122
    %p124 = scmp.ne.s32.totalorder %s112, %s113
    %p125 = scmp.eq.s32.totalorder %s19, 2
    %p126 = por %p124, %p125
    %p128 = scmp.ne.s32.totalorder %s113, %s127
    %p129 = scmp.eq.s32.totalorder %s19, 0
    %p130 = por %p128, %p129
    %s131 = ssub.s32 %s13, %s20
    %p132 = scmp.eq.s32.totalorder %s131, 0
    %s134 = sadd.s32 %s133, 1
    %s135 = scalar_select %p132, %s133, %s134
    %p138 = pneg %p132
    %p139 = scmp.eq.s32.totalorder %s13, 2
    %p140 = por %p138, %p139
    %p141 = scmp.ne.s32.totalorder %s133, %s136
    %p142 = scmp.eq.s32.totalorder %s13, 0
    %p143 = por %p141, %p142
    %p144 = scmp.ne.s32.totalorder %s133, %s136
    %p145 = scmp.eq.s32.totalorder %s18, 2
    %p146 = por %p144, %p145
    %p147 = scmp.ne.s32.totalorder %s136, %s137
    %p148 = scmp.eq.s32.totalorder %s18, 0
    %p149 = por %p147, %p148
    %p150 = scmp.ne.s32.totalorder %s136, %s137
    %p151 = scmp.eq.s32.totalorder %s19, 2
    %p152 = por %p150, %p151
    %p154 = scmp.ne.s32.totalorder %s137, %s153
    %p155 = scmp.eq.s32.totalorder %s19, 0
    %p156 = por %p154, %p155
    %p157 = scmp.le.s32.totalorder 1, %s13
    %p158 = scmp.lt.s32.totalorder %s13, 4
    %p159 = pnand %p157, %p158
    %p160 = pneg %p159
    // Predicated region
    $region9: #{label_model_forward.1} parent=5 // pred_check
      _
    $region10: #{label_model_forward.1} parent=5 // pred_check_branch
      %162 = sbr.rel (%p159) target = $region12
    $region11: #{label_model_forward.1} parent=5 // pred_region
      %s163 = ssub.s32 %s13, 1
      // Predicated region
      $region13: #{label_model_forward.1} parent=11 // pred_check
        %p164 = pneg %p60
      $region14: #{label_model_forward.1} parent=11 // pred_check_branch
        %166 = sbr.rel (%p164) target = $region16
      $region15: #{label_model_forward.1} parent=11 // pred_region
        _
      $region16: #{label_model_forward.1} parent=11 // pred_fallthru
        _
      // Predicated region
      $region17: #{label_model_forward.1} parent=11 // pred_check
        %p167 = pneg %p81
      $region18: #{label_model_forward.1} parent=11 // pred_check_branch
        %169 = sbr.rel (%p167) target = $region20
      $region19: #{label_model_forward.1} parent=11 // pred_region
        _
      $region20: #{label_model_forward.1} parent=11 // pred_fallthru
        _
      // Predicated region
      $region21: #{label_model_forward.1} parent=11 // pred_check
        %p170 = pneg %p102
      $region22: #{label_model_forward.1} parent=11 // pred_check_branch
        %172 = sbr.rel (%p170) target = $region24
      $region23: #{label_model_forward.1} parent=11 // pred_region
        _
      $region24: #{label_model_forward.1} parent=11 // pred_fallthru
        _
      // Predicated region
      $region25: #{label_model_forward.1} parent=11 // pred_check
        %p173 = pneg %p123
      $region26: #{label_model_forward.1} parent=11 // pred_check_branch
        %175 = sbr.rel (%p173) target = $region28
      $region27: #{label_model_forward.1} parent=11 // pred_region
        _
      $region28: #{label_model_forward.1} parent=11 // pred_fallthru
        _
    $region12: #{label_model_forward.1} parent=5 // pred_fallthru
      _
    %p176 = scmp.lt.s32.totalorder %s13, 3
    // Predicated region
    $region29: #{label_model_forward.1} parent=5 // pred_check
      %p177 = pneg %p176
    $region30: #{label_model_forward.1} parent=5 // pred_check_branch
      %179 = sbr.rel (%p177) target = $region32
    $region31: #{label_model_forward.1} parent=5 // pred_region
      // Predicated region
      $region33: #{label_model_forward.1} parent=31 // pred_check
        %p180 = pneg %p33
      $region34: #{label_model_forward.1} parent=31 // pred_check_branch
        %182 = sbr.rel (%p180) target = $region36
      $region35: #{label_model_forward.1} parent=31 // pred_region
        %p183 = scmp.lt.s32.totalorder %s13, 2
        %s184 = scalar_select %p183, %s13, 2
        %s185 = smul.addr %s184, 8
        %s186 = scalar_lea.vmem %s0, %s185
      $region36: #{label_model_forward.1} parent=31 // pred_fallthru
        _
    $region32: #{label_model_forward.1} parent=5 // pred_fallthru
      _
    %p187 = scmp.le.s32.totalorder 1, %s13
    %p188 = scmp.lt.s32.totalorder %s13, 4
    %p189 = pnand %p187, %p188
    %p190 = pneg %p189
    // Predicated region
    $region37: #{label_model_forward.1} parent=5 // pred_check
      _
    $region38: #{label_model_forward.1} parent=5 // pred_check_branch
      %192 = sbr.rel (%p189) target = $region40
    $region39: #{label_model_forward.1} parent=5 // pred_region
      %s193 = ssub.s32 %s13, 1
      %p194 = scmp.lt.s32.totalorder %s18, 2
      %s195 = scalar_select %p194, %s18, 2
      %s196 = smul.addr %s195, 8
      %s197 = scalar_lea.vmem %s0, %s196
      %p198 = pneg %p39
      %p199 = pneg %p36
      %p200 = pneg %p60
      %p201 = pneg %p57
      %p202 = pneg %p81
      %p203 = pneg %p78
      %p204 = pneg %p102
      %p205 = pneg %p99
      %p206 = pneg %p123
      %p207 = pneg %p120
      %p208 = pneg %p149
      %p209 = pneg %p146
      %p210 = scmp.lt.s32.totalorder %s18, 2
      %s211 = scalar_select %p210, %s18, 2
      %s212 = scalar_lea.vmem %s5, %s211
      %p213 = scmp.lt.s32.totalorder %s18, 2
      %s214 = scalar_select %p213, %s18, 2
      %s215 = smul.addr %s214, 8
      %s216 = scalar_lea.vmem %s0, %s215
      %p217 = scmp.lt.s32.totalorder %s18, 2
      %s218 = scalar_select %p217, %s18, 2
      %s219 = scalar_lea.vmem %s5, %s218
      %v220 = vld [vmem:[%s216] sm:$0xff]
      %v221 = vld [vmem:[%s1] sm:$0xff]
      %v222 = vld [vmem:[%s2] sm:$0xff]
      %224 = vset.pattern.permute.xlu0 0
      %225 = vperm.xlu0 %224, %v222
      %v226 = vpop.permute.xlu0 %225
      %vm228 = vcmask 64512
      %v230 = vsel %vm228, %v221, 0
      %232 = vmatprep.subr.mxu0 0.0
      %233 = vmatpush1.msra.mxu0 0.0
      %234 = vmatprep.subr.mxu0 0.0
      %235 = vmatpush1.msra.mxu0 0.0
      %236 = vmatprep.subr.mxu0 0.0
      %237 = vmatpush1.msra.mxu0 0.0
      %238 = vmatprep.subr.mxu0 0.0
      %239 = vmatpush1.msra.mxu0 0.0
      %240 = vmatprep.subr.mxu0 0.0
      %241 = vmatpush1.msra.mxu0 0.0
      %242 = vmatprep.subr.mxu0 0.0
      %243 = vmatpush1.msra.mxu0 0.0
      %244 = vmatprep.subr.mxu0 0.0
      %245 = vmatpush1.msra.mxu0 0.0
      %246 = vmatprep.subr.mxu0 0.0
      %247 = vmatpush1.msra.mxu0 0.0
      %248 = vmatprep.subr.mxu0 0.0
      %249 = vmatpush1.msra.mxu0 0.0
      %250 = vmatprep.subr.mxu0 0.0
      %251 = vmatpush1.msra.mxu0 0.0
      %252 = vmatprep.subr.mxu0 0.0
      %253 = vmatpush1.msra.mxu0 0.0
      %254 = vmatprep.subr.mxu0 0.0
      %255 = vmatpush1.msra.mxu0 0.0
      %256 = vmatprep.subr.mxu0 0.0
      %257 = vmatpush1.msra.mxu0 0.0
      %258 = vmatprep.subr.mxu0 0.0
      %259 = vmatpush1.msra.mxu0 0.0
      %260 = vmatprep.subr.mxu0 0.0
      %261 = vmatpush1.msra.mxu0 0.0
      %262 = vmatprep.subr.mxu0 0.0
      %263 = vmatpush1.msra.mxu0 %v220
      %264 = vmatprep.subr.mxu0 0.0
      %265 = vmatpush2.msra.mxu0 0.0
      %266 = vmatprep.subr.mxu0 0.0
      %267 = vmatpush2.msra.mxu0 0.0
      %268 = vmatprep.subr.mxu0 0.0
      %269 = vmatpush2.msra.mxu0 0.0
      %270 = vmatprep.subr.mxu0 0.0
      %271 = vmatpush2.msra.mxu0 0.0
      %272 = vmatprep.subr.mxu0 0.0
      %273 = vmatpush2.msra.mxu0 0.0
      %274 = vmatprep.subr.mxu0 0.0
      %275 = vmatpush2.msra.mxu0 0.0
      %276 = vmatprep.subr.mxu0 0.0
      %277 = vmatpush2.msra.mxu0 0.0
      %278 = vmatprep.subr.mxu0 0.0
      %279 = vmatpush2.msra.mxu0 0.0
      %280 = vmatprep.subr.mxu0 0.0
      %281 = vmatpush2.msra.mxu0 0.0
      %282 = vmatprep.subr.mxu0 0.0
      %283 = vmatpush2.msra.mxu0 0.0
      %284 = vmatprep.subr.mxu0 0.0
      %285 = vmatpush2.msra.mxu0 0.0
      %286 = vmatprep.subr.mxu0 0.0
      %287 = vmatpush2.msra.mxu0 0.0
      %288 = vmatprep.subr.mxu0 0.0
      %289 = vmatpush2.msra.mxu0 0.0
      %290 = vmatprep.subr.mxu0 0.0
      %291 = vmatpush2.msra.mxu0 0.0
      %292 = vmatprep.subr.mxu0 0.0
      %293 = vmatpush2.msra.mxu0 0.0
      %294 = vmatprep.subr.mxu0 0.0
      %295 = vmatpush2.msra.mxu0 0.0
      %296 = vmatprep.mubr.f32.mxu0 0.0
      %297 = vmatmul.mubr.f32.gmra.mxu0 %v230
      %v298 = vpop.f32.mrf.mxu0
      %v299 = vadd.f32 %v226, %v298
      %v300 = vpop.f32.mrf.mxu0
      %301 = vdwg.mxu0
      %v302 = vmax.f32 %v299, 0.0
      %v303 = vld [vmem:[%s3] sm:$0x1]
      %v304 = vld [vmem:[#allocation2] sm:$0x1]
      %306 = vset.pattern.permute.xlu0 0
      %307 = vperm.xlu0 %306, %v304
      %v308 = vpop.permute.xlu0 %307
      %v310 = vlaneseq
      %v311 = vshrl.u32 %v310, 7
      %v312 = vsub.s32 0, %v311
      %v313 = vrot.slane %v308, %v312
      %v315 = vsel %vm228, %v303, 0
      %317 = vmatprep.subr.mxu0 0.0
      %318 = vmatpush1.msra.mxu0 0.0
      %319 = vmatprep.subr.mxu0 0.0
      %320 = vmatpush1.msra.mxu0 0.0
      %321 = vmatprep.subr.mxu0 0.0
      %322 = vmatpush1.msra.mxu0 0.0
      %323 = vmatprep.subr.mxu0 0.0
      %324 = vmatpush1.msra.mxu0 0.0
      %325 = vmatprep.subr.mxu0 0.0
      %326 = vmatpush1.msra.mxu0 0.0
      %327 = vmatprep.subr.mxu0 0.0
      %328 = vmatpush1.msra.mxu0 0.0
      %329 = vmatprep.subr.mxu0 0.0
      %330 = vmatpush1.msra.mxu0 0.0
      %331 = vmatprep.subr.mxu0 0.0
      %332 = vmatpush1.msra.mxu0 0.0
      %333 = vmatprep.subr.mxu0 0.0
      %334 = vmatpush1.msra.mxu0 0.0
      %335 = vmatprep.subr.mxu0 0.0
      %336 = vmatpush1.msra.mxu0 0.0
      %337 = vmatprep.subr.mxu0 0.0
      %338 = vmatpush1.msra.mxu0 0.0
      %339 = vmatprep.subr.mxu0 0.0
      %340 = vmatpush1.msra.mxu0 0.0
      %341 = vmatprep.subr.mxu0 0.0
      %342 = vmatpush1.msra.mxu0 0.0
      %343 = vmatprep.subr.mxu0 0.0
      %344 = vmatpush1.msra.mxu0 0.0
      %345 = vmatprep.subr.mxu0 0.0
      %346 = vmatpush1.msra.mxu0 0.0
      %347 = vmatprep.subr.mxu0 0.0
      %348 = vmatpush1.msra.mxu0 %v302
      %349 = vmatprep.subr.mxu0 0.0
      %350 = vmatpush2.msra.mxu0 0.0
      %351 = vmatprep.subr.mxu0 0.0
      %352 = vmatpush2.msra.mxu0 0.0
      %353 = vmatprep.subr.mxu0 0.0
      %354 = vmatpush2.msra.mxu0 0.0
      %355 = vmatprep.subr.mxu0 0.0
      %356 = vmatpush2.msra.mxu0 0.0
      %357 = vmatprep.subr.mxu0 0.0
      %358 = vmatpush2.msra.mxu0 0.0
      %359 = vmatprep.subr.mxu0 0.0
      %360 = vmatpush2.msra.mxu0 0.0
      %361 = vmatprep.subr.mxu0 0.0
      %362 = vmatpush2.msra.mxu0 0.0
      %363 = vmatprep.subr.mxu0 0.0
      %364 = vmatpush2.msra.mxu0 0.0
      %365 = vmatprep.subr.mxu0 0.0
      %366 = vmatpush2.msra.mxu0 0.0
      %367 = vmatprep.subr.mxu0 0.0
      %368 = vmatpush2.msra.mxu0 0.0
      %369 = vmatprep.subr.mxu0 0.0
      %370 = vmatpush2.msra.mxu0 0.0
      %371 = vmatprep.subr.mxu0 0.0
      %372 = vmatpush2.msra.mxu0 0.0
      %373 = vmatprep.subr.mxu0 0.0
      %374 = vmatpush2.msra.mxu0 0.0
      %375 = vmatprep.subr.mxu0 0.0
      %376 = vmatpush2.msra.mxu0 0.0
      %377 = vmatprep.subr.mxu0 0.0
      %378 = vmatpush2.msra.mxu0 0.0
      %379 = vmatprep.subr.mxu0 0.0
      %380 = vmatpush2.msra.mxu0 0.0
      %381 = vmatprep.mubr.f32.mxu0 0.0
      %382 = vmatmul.mubr.f32.gmra.mxu0 %v315
      %v383 = vpop.f32.mrf.mxu0
      %v384 = vadd.f32 %v313, %v383
      %v385 = vpop.f32.mrf.mxu0
      %386 = vdwg.mxu0
      %v387 = vsub.f32 0.0, %v384
      %v388 = vmul.f32 %v387, 1.442695
      %v389 = vpow.pop %v388
      %v390 = vadd.f32 %v389, 1.0
      %v391 = vrcp.pop %v390
      %392 = vst [vmem:[%s219] sm:$0x1] %v391
      %p393 = scmp.lt.s32.totalorder %s18, 2
      %s394 = scalar_select %p393, %s18, 2
      %s395 = scalar_lea.vmem %s5, %s394
      // Predicated region
      $region41: #{label_model_forward.1} parent=39 // pred_check
        %p396 = pneg %p146
      $region42: #{label_model_forward.1} parent=39 // pred_check_branch
        %398 = sbr.rel (%p396) target = $region44
      $region43: #{label_model_forward.1} parent=39 // pred_region
        _
      $region44: #{label_model_forward.1} parent=39 // pred_fallthru
        _
    $region40: #{label_model_forward.1} parent=5 // pred_fallthru
      _
    %p399 = scmp.le.s32.totalorder 2, %s13
    // Predicated region
    $region45: #{label_model_forward.1} parent=5 // pred_check
      %p400 = pneg %p399
    $region46: #{label_model_forward.1} parent=5 // pred_check_branch
      %402 = sbr.rel (%p400) target = $region48
    $region47: #{label_model_forward.1} parent=5 // pred_region
      %s403 = ssub.s32 %s13, 2
      // Predicated region
      $region49: #{label_model_forward.1} parent=47 // pred_check
        %p404 = pneg %p152
      $region50: #{label_model_forward.1} parent=47 // pred_check_branch
        %406 = sbr.rel (%p404) target = $region52
      $region51: #{label_model_forward.1} parent=47 // pred_region
        %p407 = scmp.lt.s32.totalorder %s19, 2
        %s408 = scalar_select %p407, %s19, 2
        %s409 = scalar_lea.vmem %s5, %s408
      $region52: #{label_model_forward.1} parent=47 // pred_fallthru
        _
    $region48: #{label_model_forward.1} parent=5 // pred_fallthru
      _
  $region6: #{label_model_forward.1} parent=0 // loop_footer
    %s17 = sadd.s32 1, %s13
  $region7: #{label_model_forward.1} parent=0 // loop_footer_branch
    %12 = sbr.rel target = $region3
  $region8: #{label_model_forward.1} parent=0 // loop_exit
    _

</llo_original>
